<compile_context>
chip_gen: v7x
topology: tpu7x:2x2x1
jax: 0.10.0
libtpu: 0.0.40
codegen_flags: <defaults>
</compile_context>

<pallas_src>
import functools

import jax
import jax.numpy as jnp
from jax.experimental import pallas as pl
from jax.experimental.pallas import tpu as pltpu


def _critic_fused_kernel(x_ref, w_in_ref, b_in_ref, w_hid_ref, b_hid_ref,
                         w_out_ref, b_out_ref, o_ref, *, n_hidden):
    """One (TILE_M, D_in) row-tile through the whole critic MLP.

    Weights are whole-array VMEM-resident (constant index_maps); matmuls use
    bf16 operands with f32 accumulation; bias/tanh stay f32.
    """
    # Layer 0: (TILE_M, D_in) @ (D_in, F) + b -> tanh
    h = jnp.tanh(
        jnp.dot(x_ref[...].astype(jnp.bfloat16), w_in_ref[...],
                preferred_element_type=jnp.float32)
        + b_in_ref[...]
    )
    # Hidden layers: statically-unrolled loop over stacked (n_hidden, F, F)
    # weights; `h` stays on-chip the whole time.
    for l in range(n_hidden):
        h = jnp.tanh(
            jnp.dot(h.astype(jnp.bfloat16), w_hid_ref[l],
                    preferred_element_type=jnp.float32)
            + b_hid_ref[l]
        )
    # Output head (fc -> 1): VPU multiply + lane reduction instead of an
    # (TILE_M, fc) @ (fc, 1) matmul — keeps the tail off the MXU.
    w_out_row = w_out_ref[...].astype(jnp.float32)            # (1, fc)
    y = jnp.sum(h * w_out_row, axis=-1, keepdims=True) + b_out_ref[...]
    o_ref[...] = y.astype(o_ref.dtype)


def init_critic_params(key, input_dims, fc1_dims, fc2_dims, n_hidden=6,
                       weight_dtype=jnp.bfloat16):
    """PyTorch nn.Linear-style init (uniform +/- 1/sqrt(fan_in)), pre-packed
    for the fused kernel: hidden layers stacked along a leading axis, weights
    cast once to bf16, biases kept f32, output weight stored as a (1, fc) row.
    """
    assert fc1_dims == fc2_dims  # the module uses fc1_dims == fc2_dims
    fc = fc1_dims

    def linear_init(k, fan_in, fan_out):
        kw, kb = jax.random.split(k)
        bound = 1.0 / (fan_in ** 0.5)
        w = jax.random.uniform(kw, (fan_in, fan_out), jnp.float32, -bound, bound)
        b = jax.random.uniform(kb, (fan_out,), jnp.float32, -bound, bound)
        return w, b

    keys = jax.random.split(key, n_hidden + 2)
    w_in, b_in = linear_init(keys[0], input_dims, fc)
    hid = [linear_init(keys[1 + i], fc, fc) for i in range(n_hidden)]
    w_hid = jnp.stack([w for w, _ in hid])               # (n_hidden, fc, fc)
    b_hid = jnp.stack([b for _, b in hid])[:, None, :]   # (n_hidden, 1, fc)
    w_out, b_out = linear_init(keys[-1], fc, 1)          # (fc, 1), (1,)
    return dict(
        w_in=w_in.astype(weight_dtype),          # (input_dims, fc)  bf16
        b_in=b_in.reshape(1, fc),                # (1, fc)           f32
        w_hid=w_hid.astype(weight_dtype),        # (n_hidden, fc, fc) bf16
        b_hid=b_hid,                             # (n_hidden, 1, fc) f32
        w_out=w_out.T.astype(weight_dtype),      # (1, fc)           bf16
        b_out=b_out.reshape(1, 1),               # (1, 1)            f32
    )


def critic_forward(params, state, *, tile_m=128):
    """Matches CriticNetwork.forward: value = self.critic(state) -> (batch, 1)."""
    M, D = state.shape
    n_hidden = params["w_hid"].shape[0]

    # Pick a row tile: multiple of 8, capped by the (padded) batch size.
    if M < tile_m:
        tile_m = max(8, ((M + 7) // 8) * 8)
    num_tiles = pl.cdiv(M, tile_m)
    m_pad = num_tiles * tile_m
    if m_pad != M:
        state_p = jnp.zeros((m_pad, D), state.dtype).at[:M].set(state)
    else:
        state_p = state

    kernel = functools.partial(_critic_fused_kernel, n_hidden=n_hidden)

    const2 = lambda i: (0, 0)
    const3 = lambda i: (0, 0, 0)

    out = pl.pallas_call(
        kernel,
        out_shape=jax.ShapeDtypeStruct((m_pad, 1), state.dtype),
        grid=(num_tiles,),
        in_specs=[
            pl.BlockSpec((tile_m, D), lambda i: (i, 0)),          # state tile
            pl.BlockSpec(params["w_in"].shape, const2),           # VMEM-resident
            pl.BlockSpec(params["b_in"].shape, const2),
            pl.BlockSpec(params["w_hid"].shape, const3),
            pl.BlockSpec(params["b_hid"].shape, const3),
            pl.BlockSpec(params["w_out"].shape, const2),
            pl.BlockSpec(params["b_out"].shape, const2),
        ],
        out_specs=pl.BlockSpec((tile_m, 1), lambda i: (i, 0)),
        compiler_params=pltpu.CompilerParams(
            dimension_semantics=("parallel",)),                   # v7x: 2 TCs
    )(
        state_p,
        params["w_in"], params["b_in"],
        params["w_hid"], params["b_hid"],
        params["w_out"], params["b_out"],
    )
    return out[:M]


if __name__ == "__main__":
    # Small shapes consistent with the module (fc1_dims == fc2_dims in forward).
    batch = 8
    input_dims = 32
    fc_dims = 128

    key = jax.random.PRNGKey(0)
    key, kx = jax.random.split(key)
    state = jax.random.normal(kx, (batch, input_dims), jnp.float32)

    params = init_critic_params(key, input_dims, fc_dims, fc_dims)

    value = jax.jit(critic_forward)(params, state)
    value = jax.block_until_ready(value)

    # Pure-JAX reference of the same math (bf16 matmul operands, f32 accum).
    h = jnp.tanh(
        jnp.dot(state.astype(jnp.bfloat16), params["w_in"],
                preferred_element_type=jnp.float32) + params["b_in"])
    for l in range(params["w_hid"].shape[0]):
        h = jnp.tanh(
            jnp.dot(h.astype(jnp.bfloat16), params["w_hid"][l],
                    preferred_element_type=jnp.float32) + params["b_hid"][l])
    ref = (jnp.sum(h * params["w_out"].astype(jnp.float32), axis=-1,
                   keepdims=True) + params["b_out"])

    assert value.shape == (batch, 1)
    assert jnp.allclose(value, ref, atol=1e-3, rtol=1e-3)

    print("KERNEL_OK")
</pallas_src>

<mosaic_0001>
module attributes {stable_mosaic.version = 11 : i64} {
  func.func @_critic_fused_kernel(%arg0: i32, %arg1: memref<8x32xf32, #tpu.memory_space<vmem>>, %arg2: memref<32x128xbf16, #tpu.memory_space<vmem>>, %arg3: memref<1x128xf32, #tpu.memory_space<vmem>>, %arg4: memref<6x128x128xbf16, #tpu.memory_space<vmem>>, %arg5: memref<6x1x128xf32, #tpu.memory_space<vmem>>, %arg6: memref<1x128xbf16, #tpu.memory_space<vmem>>, %arg7: memref<1x1xf32, #tpu.memory_space<vmem>>, %arg8: memref<8x1xf32, #tpu.memory_space<vmem>>) attributes {dimension_semantics = [#tpu.dimension_semantics<parallel>], iteration_bounds = array<i64: 1>, scalar_prefetch = 0 : i64, scratch_operands = 0 : i64, tpu.core_type = #tpu.core_type<tc>, window_params = [{transform_indices = @transform_0, window_bounds = array<i64: 8, 32>}, {pipeline_mode = #tpu.pipeline_mode<synchronous>, transform_indices = @transform_1, window_bounds = array<i64: 32, 128>}, {pipeline_mode = #tpu.pipeline_mode<synchronous>, transform_indices = @transform_2, window_bounds = array<i64: 1, 128>}, {pipeline_mode = #tpu.pipeline_mode<synchronous>, transform_indices = @transform_3, window_bounds = array<i64: 6, 128, 128>}, {pipeline_mode = #tpu.pipeline_mode<synchronous>, transform_indices = @transform_4, window_bounds = array<i64: 6, 1, 128>}, {pipeline_mode = #tpu.pipeline_mode<synchronous>, transform_indices = @transform_5, window_bounds = array<i64: 1, 128>}, {pipeline_mode = #tpu.pipeline_mode<synchronous>, transform_indices = @transform_6, window_bounds = array<i64: 1, 1>}, {transform_indices = @transform_7, window_bounds = array<i64: 8, 1>}]} {
    %c0 = arith.constant 0 : index
    %c0_0 = arith.constant 0 : index
    %0 = vector.load %arg1[%c0, %c0_0] : memref<8x32xf32, #tpu.memory_space<vmem>>, vector<8x32xf32>
    %1 = arith.truncf %0 : vector<8x32xf32> to vector<8x32xbf16>
    %c0_1 = arith.constant 0 : index
    %c0_2 = arith.constant 0 : index
    %2 = vector.load %arg2[%c0_1, %c0_2] : memref<32x128xbf16, #tpu.memory_space<vmem>>, vector<32x128xbf16>
    %cst = arith.constant dense<0.000000e+00> : vector<8x128xf32>
    %3 = tpu.matmul %1, %2, %cst {dimension_numbers = #tpu.dot_dimension_numbers<[1], [0], [0], [1], [0, 0, 1, 1], [], []>} : vector<8x32xbf16>, vector<32x128xbf16>, vector<8x128xf32> -> vector<8x128xf32>
    %c0_3 = arith.constant 0 : index
    %c0_4 = arith.constant 0 : index
    %4 = vector.load %arg3[%c0_3, %c0_4] : memref<1x128xf32, #tpu.memory_space<vmem>>, vector<1x128xf32>
    %5 = vector.broadcast %4 : vector<1x128xf32> to vector<8x128xf32>
    %6 = arith.addf %3, %5 : vector<8x128xf32>
    %7 = math.tanh %6 : vector<8x128xf32>
    %8 = arith.truncf %7 : vector<8x128xf32> to vector<8x128xbf16>
    %c0_5 = arith.constant 0 : index
    %c0_6 = arith.constant 0 : index
    %c0_7 = arith.constant 0 : index
    %9 = vector.load %arg4[%c0_5, %c0_6, %c0_7] : memref<6x128x128xbf16, #tpu.memory_space<vmem>>, vector<1x128x128xbf16>
    %10 = vector.shape_cast %9 : vector<1x128x128xbf16> to vector<128x128xbf16>
    %cst_8 = arith.constant dense<0.000000e+00> : vector<8x128xf32>
    %11 = tpu.matmul %8, %10, %cst_8 {dimension_numbers = #tpu.dot_dimension_numbers<[1], [0], [0], [1], [0, 0, 1, 1], [], []>} : vector<8x128xbf16>, vector<128x128xbf16>, vector<8x128xf32> -> vector<8x128xf32>
    %c0_9 = arith.constant 0 : index
    %c0_10 = arith.constant 0 : index
    %c0_11 = arith.constant 0 : index
    %12 = vector.load %arg5[%c0_9, %c0_10, %c0_11] : memref<6x1x128xf32, #tpu.memory_space<vmem>>, vector<1x1x128xf32>
    %13 = vector.shape_cast %12 : vector<1x1x128xf32> to vector<1x128xf32>
    %14 = vector.broadcast %13 : vector<1x128xf32> to vector<8x128xf32>
    %15 = arith.addf %11, %14 : vector<8x128xf32>
    %16 = math.tanh %15 : vector<8x128xf32>
    %17 = arith.truncf %16 : vector<8x128xf32> to vector<8x128xbf16>
    %c1 = arith.constant 1 : index
    %c0_12 = arith.constant 0 : index
    %c0_13 = arith.constant 0 : index
    %18 = vector.load %arg4[%c1, %c0_12, %c0_13] : memref<6x128x128xbf16, #tpu.memory_space<vmem>>, vector<1x128x128xbf16>
    %19 = vector.shape_cast %18 : vector<1x128x128xbf16> to vector<128x128xbf16>
    %cst_14 = arith.constant dense<0.000000e+00> : vector<8x128xf32>
    %20 = tpu.matmul %17, %19, %cst_14 {dimension_numbers = #tpu.dot_dimension_numbers<[1], [0], [0], [1], [0, 0, 1, 1], [], []>} : vector<8x128xbf16>, vector<128x128xbf16>, vector<8x128xf32> -> vector<8x128xf32>
    %c1_15 = arith.constant 1 : index
    %c0_16 = arith.constant 0 : index
    %c0_17 = arith.constant 0 : index
    %21 = vector.load %arg5[%c1_15, %c0_16, %c0_17] : memref<6x1x128xf32, #tpu.memory_space<vmem>>, vector<1x1x128xf32>
    %22 = vector.shape_cast %21 : vector<1x1x128xf32> to vector<1x128xf32>
    %23 = vector.broadcast %22 : vector<1x128xf32> to vector<8x128xf32>
    %24 = arith.addf %20, %23 : vector<8x128xf32>
    %25 = math.tanh %24 : vector<8x128xf32>
    %26 = arith.truncf %25 : vector<8x128xf32> to vector<8x128xbf16>
    %c2 = arith.constant 2 : index
    %c0_18 = arith.constant 0 : index
    %c0_19 = arith.constant 0 : index
    %27 = vector.load %arg4[%c2, %c0_18, %c0_19] : memref<6x128x128xbf16, #tpu.memory_space<vmem>>, vector<1x128x128xbf16>
    %28 = vector.shape_cast %27 : vector<1x128x128xbf16> to vector<128x128xbf16>
    %cst_20 = arith.constant dense<0.000000e+00> : vector<8x128xf32>
    %29 = tpu.matmul %26, %28, %cst_20 {dimension_numbers = #tpu.dot_dimension_numbers<[1], [0], [0], [1], [0, 0, 1, 1], [], []>} : vector<8x128xbf16>, vector<128x128xbf16>, vector<8x128xf32> -> vector<8x128xf32>
    %c2_21 = arith.constant 2 : index
    %c0_22 = arith.constant 0 : index
    %c0_23 = arith.constant 0 : index
    %30 = vector.load %arg5[%c2_21, %c0_22, %c0_23] : memref<6x1x128xf32, #tpu.memory_space<vmem>>, vector<1x1x128xf32>
    %31 = vector.shape_cast %30 : vector<1x1x128xf32> to vector<1x128xf32>
    %32 = vector.broadcast %31 : vector<1x128xf32> to vector<8x128xf32>
    %33 = arith.addf %29, %32 : vector<8x128xf32>
    %34 = math.tanh %33 : vector<8x128xf32>
    %35 = arith.truncf %34 : vector<8x128xf32> to vector<8x128xbf16>
    %c3 = arith.constant 3 : index
    %c0_24 = arith.constant 0 : index
    %c0_25 = arith.constant 0 : index
    %36 = vector.load %arg4[%c3, %c0_24, %c0_25] : memref<6x128x128xbf16, #tpu.memory_space<vmem>>, vector<1x128x128xbf16>
    %37 = vector.shape_cast %36 : vector<1x128x128xbf16> to vector<128x128xbf16>
    %cst_26 = arith.constant dense<0.000000e+00> : vector<8x128xf32>
    %38 = tpu.matmul %35, %37, %cst_26 {dimension_numbers = #tpu.dot_dimension_numbers<[1], [0], [0], [1], [0, 0, 1, 1], [], []>} : vector<8x128xbf16>, vector<128x128xbf16>, vector<8x128xf32> -> vector<8x128xf32>
    %c3_27 = arith.constant 3 : index
    %c0_28 = arith.constant 0 : index
    %c0_29 = arith.constant 0 : index
    %39 = vector.load %arg5[%c3_27, %c0_28, %c0_29] : memref<6x1x128xf32, #tpu.memory_space<vmem>>, vector<1x1x128xf32>
    %40 = vector.shape_cast %39 : vector<1x1x128xf32> to vector<1x128xf32>
    %41 = vector.broadcast %40 : vector<1x128xf32> to vector<8x128xf32>
    %42 = arith.addf %38, %41 : vector<8x128xf32>
    %43 = math.tanh %42 : vector<8x128xf32>
    %44 = arith.truncf %43 : vector<8x128xf32> to vector<8x128xbf16>
    %c4 = arith.constant 4 : index
    %c0_30 = arith.constant 0 : index
    %c0_31 = arith.constant 0 : index
    %45 = vector.load %arg4[%c4, %c0_30, %c0_31] : memref<6x128x128xbf16, #tpu.memory_space<vmem>>, vector<1x128x128xbf16>
    %46 = vector.shape_cast %45 : vector<1x128x128xbf16> to vector<128x128xbf16>
    %cst_32 = arith.constant dense<0.000000e+00> : vector<8x128xf32>
    %47 = tpu.matmul %44, %46, %cst_32 {dimension_numbers = #tpu.dot_dimension_numbers<[1], [0], [0], [1], [0, 0, 1, 1], [], []>} : vector<8x128xbf16>, vector<128x128xbf16>, vector<8x128xf32> -> vector<8x128xf32>
    %c4_33 = arith.constant 4 : index
    %c0_34 = arith.constant 0 : index
    %c0_35 = arith.constant 0 : index
    %48 = vector.load %arg5[%c4_33, %c0_34, %c0_35] : memref<6x1x128xf32, #tpu.memory_space<vmem>>, vector<1x1x128xf32>
    %49 = vector.shape_cast %48 : vector<1x1x128xf32> to vector<1x128xf32>
    %50 = vector.broadcast %49 : vector<1x128xf32> to vector<8x128xf32>
    %51 = arith.addf %47, %50 : vector<8x128xf32>
    %52 = math.tanh %51 : vector<8x128xf32>
    %53 = arith.truncf %52 : vector<8x128xf32> to vector<8x128xbf16>
    %c5 = arith.constant 5 : index
    %c0_36 = arith.constant 0 : index
    %c0_37 = arith.constant 0 : index
    %54 = vector.load %arg4[%c5, %c0_36, %c0_37] : memref<6x128x128xbf16, #tpu.memory_space<vmem>>, vector<1x128x128xbf16>
    %55 = vector.shape_cast %54 : vector<1x128x128xbf16> to vector<128x128xbf16>
    %cst_38 = arith.constant dense<0.000000e+00> : vector<8x128xf32>
    %56 = tpu.matmul %53, %55, %cst_38 {dimension_numbers = #tpu.dot_dimension_numbers<[1], [0], [0], [1], [0, 0, 1, 1], [], []>} : vector<8x128xbf16>, vector<128x128xbf16>, vector<8x128xf32> -> vector<8x128xf32>
    %c5_39 = arith.constant 5 : index
    %c0_40 = arith.constant 0 : index
    %c0_41 = arith.constant 0 : index
    %57 = vector.load %arg5[%c5_39, %c0_40, %c0_41] : memref<6x1x128xf32, #tpu.memory_space<vmem>>, vector<1x1x128xf32>
    %58 = vector.shape_cast %57 : vector<1x1x128xf32> to vector<1x128xf32>
    %59 = vector.broadcast %58 : vector<1x128xf32> to vector<8x128xf32>
    %60 = arith.addf %56, %59 : vector<8x128xf32>
    %61 = math.tanh %60 : vector<8x128xf32>
    %c0_42 = arith.constant 0 : index
    %c0_43 = arith.constant 0 : index
    %62 = vector.load %arg6[%c0_42, %c0_43] : memref<1x128xbf16, #tpu.memory_space<vmem>>, vector<1x128xbf16>
    %63 = arith.extf %62 : vector<1x128xbf16> to vector<1x128xf32>
    %64 = vector.broadcast %63 : vector<1x128xf32> to vector<8x128xf32>
    %65 = arith.mulf %61, %64 : vector<8x128xf32>
    %cst_44 = arith.constant dense<0.000000e+00> : vector<8xf32>
    %66 = vector.multi_reduction <add>, %65, %cst_44 [1] : vector<8x128xf32> to vector<8xf32>
    %67 = vector.shape_cast %66 : vector<8xf32> to vector<8x1xf32>
    %c0_45 = arith.constant 0 : index
    %c0_46 = arith.constant 0 : index
    %68 = vector.load %arg7[%c0_45, %c0_46] : memref<1x1xf32, #tpu.memory_space<vmem>>, vector<1x1xf32>
    %69 = vector.broadcast %68 : vector<1x1xf32> to vector<8x1xf32>
    %70 = arith.addf %67, %69 : vector<8x1xf32>
    %c0_47 = arith.constant 0 : index
    %c0_48 = arith.constant 0 : index
    %71 = vector.load %arg8[%c0_47, %c0_48] : memref<8x1xf32, #tpu.memory_space<vmem>>, vector<8x1xf32>
    tpu.vector_store %arg8[%c0_47, %c0_48], %70 {strides = array<i32>} : memref<8x1xf32, #tpu.memory_space<vmem>>, vector<8x1xf32>,
    return
  }
  func.func @transform_0(%arg0: i32) -> (i32, i32) {
    %c0_i32 = arith.constant 0 : i32
    %c0_i32_0 = arith.constant 0 : i32
    return %arg0, %c0_i32 : i32, i32
  }
  func.func @transform_1(%arg0: i32) -> (i32, i32) {
    %c0_i32 = arith.constant 0 : i32
    %c0_i32_0 = arith.constant 0 : i32
    %c0_i32_1 = arith.constant 0 : i32
    return %c0_i32, %c0_i32_0 : i32, i32
  }
  func.func @transform_2(%arg0: i32) -> (i32, i32) {
    %c0_i32 = arith.constant 0 : i32
    %c0_i32_0 = arith.constant 0 : i32
    %c0_i32_1 = arith.constant 0 : i32
    return %c0_i32, %c0_i32_0 : i32, i32
  }
  func.func @transform_3(%arg0: i32) -> (i32, i32, i32) {
    %c0_i32 = arith.constant 0 : i32
    %c0_i32_0 = arith.constant 0 : i32
    %c0_i32_1 = arith.constant 0 : i32
    %c0_i32_2 = arith.constant 0 : i32
    return %c0_i32, %c0_i32_0, %c0_i32_1 : i32, i32, i32
  }
  func.func @transform_4(%arg0: i32) -> (i32, i32, i32) {
    %c0_i32 = arith.constant 0 : i32
    %c0_i32_0 = arith.constant 0 : i32
    %c0_i32_1 = arith.constant 0 : i32
    %c0_i32_2 = arith.constant 0 : i32
    return %c0_i32, %c0_i32_0, %c0_i32_1 : i32, i32, i32
  }
  func.func @transform_5(%arg0: i32) -> (i32, i32) {
    %c0_i32 = arith.constant 0 : i32
    %c0_i32_0 = arith.constant 0 : i32
    %c0_i32_1 = arith.constant 0 : i32
    return %c0_i32, %c0_i32_0 : i32, i32
  }
  func.func @transform_6(%arg0: i32) -> (i32, i32) {
    %c0_i32 = arith.constant 0 : i32
    %c0_i32_0 = arith.constant 0 : i32
    %c0_i32_1 = arith.constant 0 : i32
    return %c0_i32, %c0_i32_0 : i32, i32
  }
  func.func @transform_7(%arg0: i32) -> (i32, i32) {
    %c0_i32 = arith.constant 0 : i32
    %c0_i32_0 = arith.constant 0 : i32
    return %arg0, %c0_i32 : i32, i32
  }
}

</mosaic_0001>

<llo_original>
// kernel: critic_forward.1
$region0: #{critic_forward.1}
  #allocation0 [shape = 'u32[]', space=smem, size = 0x4, offset = 0x4, fixed_abs, tag = 'smem constant byte address 0x4 - core index']
  #allocation1 [shape = 'u32[144,128]{1,0:T(1,128)}', space=vmem, size = 0x12000, scoped, tag = 'internal scratch']
  #allocation2 [shape = 'f32[1,1]{1,0:T(1,128)S(1)}', space=vmem, size = 0x200, scoped, tag = 'scoped memory for critic_forward.1']
  %s0 = inlined_call_operand.vmem [shape: f32[8,32], index: 0, kind: input, shape index: {}]
  %s1 = inlined_call_operand.hbm [shape: bf16[32,128], index: 1, kind: input, shape index: {}]
  %s2 = inlined_call_operand.vmem [shape: f32[1,128], index: 2, kind: input, shape index: {}]
  %s3 = inlined_call_operand.hbm [shape: bf16[6,128,128], index: 3, kind: input, shape index: {}]
  %s4 = inlined_call_operand.hbm [shape: f32[6,1,128], index: 4, kind: input, shape index: {}]
  %s5 = inlined_call_operand.vmem [shape: bf16[1,128], index: 5, kind: input, shape index: {}]
  %s6 = inlined_call_operand.<no memory space> [shape: f32[1,1], index: 6, kind: input, shape index: {}]
  %s7 = inlined_call_operand.vmem [shape: f32[8,1], index: 7, kind: output, shape index: {}]
  %s8 = sld [smem:[#allocation0]]
  $region50: #{critic_forward.1} parent=0
    _
  %s10 = ssub.s32 1, %s8
  %s11 = scalar_select 0, %s10, %s8
  %v12 = vstv %s6
  %13 = vst [vmem:[#allocation2] sm:$0x1] %v12
  $region1: #{critic_forward.1} parent=0
    #allocation3 [shape = 'u8[8192]{0}', space=vmem, size = 0x2000, scoped, tag = 'input window, operand 1, single buffered']
    #allocation4 [shape = 's32[1]{0}', space=sflag, size = 0x4, scoped, tag = 'scoped memory for critic_forward.1']
    #allocation5 [shape = 'u8[196608]{0}', space=vmem, size = 0x30000, scoped, tag = 'input window, operand 3, single buffered']
    #allocation6 [shape = 's32[1]{0}', space=sflag, size = 0x4, scoped, tag = 'scoped memory for critic_forward.1']
    #allocation7 [shape = 'u8[3072]{0}', space=vmem, size = 0xc00, scoped, tag = 'input window, operand 4, single buffered']
    %14 = vsyncpa [#allocation4], 0
    %15 = vsyncpa [#allocation6], 0
    // Predicated region
    $region2: #{critic_forward.1} parent=1 // pred_check
      _
    $region3: #{critic_forward.1} parent=1 // pred_check_branch
      %17 = sbr.rel (0) target = $region5
    $region4: #{critic_forward.1} parent=1 // pred_region
      _
    $region5: #{critic_forward.1} parent=1 // pred_fallthru
      _
    // Predicated region
    $region6: #{critic_forward.1} parent=1 // pred_check
      _
    $region7: #{critic_forward.1} parent=1 // pred_check_branch
      %19 = sbr.rel (0) target = $region9
    $region8: #{critic_forward.1} parent=1 // pred_region
      %s21 = ssub.s32 256, 256
      %22 = vsyncadd [#allocation4], %s21
      %s23 = sshll.u32 [#allocation3], 4
      %s24 = int_to_ptr.vmem [resolvable:$true] %s23
      %29 = dma.hbm_to_vmem [thread:$0]  %s1, 256, %s24, [#allocation4], 64, 64, 4
    $region9: #{critic_forward.1} parent=1 // pred_fallthru
      _
    // Predicated region
    $region10: #{critic_forward.1} parent=1 // pred_check
      _
    $region11: #{critic_forward.1} parent=1 // pred_check_branch
      %31 = sbr.rel (0) target = $region13
    $region12: #{critic_forward.1} parent=1 // pred_region
      _
    $region13: #{critic_forward.1} parent=1 // pred_fallthru
      _
    // Predicated region
    $region14: #{critic_forward.1} parent=1 // pred_check
      _
    $region15: #{critic_forward.1} parent=1 // pred_check_branch
      %33 = sbr.rel (0) target = $region17
    $region16: #{critic_forward.1} parent=1 // pred_region
      %s35 = ssub.s32 6144, 6144
      %36 = vsyncadd [#allocation6], %s35
      %s37 = sshll.u32 [#allocation5], 4
      %s38 = int_to_ptr.vmem [resolvable:$true] %s37
      %43 = dma.hbm_to_vmem [thread:$0]  %s3, 6144, %s38, [#allocation6], 64, 64, 4
    $region17: #{critic_forward.1} parent=1 // pred_fallthru
      _
    // Predicated region
    $region18: #{critic_forward.1} parent=1 // pred_check
      _
    $region19: #{critic_forward.1} parent=1 // pred_check_branch
      %45 = sbr.rel (0) target = $region21
    $region20: #{critic_forward.1} parent=1 // pred_region
      %s47 = ssub.s32 96, 96
      %48 = vsyncadd [#allocation6], %s47
      %s49 = sshll.u32 [#allocation7], 4
      %s50 = int_to_ptr.vmem [resolvable:$true] %s49
      %55 = dma.hbm_to_vmem [thread:$0]  %s4, 96, %s50, [#allocation6], 16, 16, 1
    $region21: #{critic_forward.1} parent=1 // pred_fallthru
      _
    // Predicated region
    $region22: #{critic_forward.1} parent=1 // pred_check
      _
    $region23: #{critic_forward.1} parent=1 // pred_check_branch
      %57 = sbr.rel (0) target = $region25
    $region24: #{critic_forward.1} parent=1 // pred_region
      _
    $region25: #{critic_forward.1} parent=1 // pred_fallthru
      _
    // Predicated region
    $region26: #{critic_forward.1} parent=1 // pred_check
      _
    $region27: #{critic_forward.1} parent=1 // pred_check_branch
      %59 = sbr.rel (0) target = $region29
    $region28: #{critic_forward.1} parent=1 // pred_region
      _
    $region29: #{critic_forward.1} parent=1 // pred_fallthru
      _
    // Predicated region
    $region30: #{critic_forward.1} parent=1 // pred_check
      _
    $region31: #{critic_forward.1} parent=1 // pred_check_branch
      %61 = sbr.rel (0) target = $region33
    $region32: #{critic_forward.1} parent=1 // pred_region
      %62 = dma.done [#allocation4], 256
    $region33: #{critic_forward.1} parent=1 // pred_fallthru
      _
    // Predicated region
    $region34: #{critic_forward.1} parent=1 // pred_check
      _
    $region35: #{critic_forward.1} parent=1 // pred_check_branch
      %64 = sbr.rel (0) target = $region37
    $region36: #{critic_forward.1} parent=1 // pred_region
      %65 = dma.done [#allocation6], 6144
    $region37: #{critic_forward.1} parent=1 // pred_fallthru
      _
    // Predicated region
    $region38: #{critic_forward.1} parent=1 // pred_check
      _
    $region39: #{critic_forward.1} parent=1 // pred_check_branch
      %67 = sbr.rel (0) target = $region41
    $region40: #{critic_forward.1} parent=1 // pred_region
      %68 = dma.done [#allocation6], 96
    $region41: #{critic_forward.1} parent=1 // pred_fallthru
      _
    %v70 = vld [vmem:[%s0] sm:$0xff]
    %v71 = vpack.c.bf16 %v70, %v70
    %v72 = vld [vmem:[#allocation3] sm:$0xf]
    %v73 = vld [vmem:[#allocation3 + $0x4] sm:$0xf]
    %v74 = vld [vmem:[#allocation3 + $0x8] sm:$0xf]
    %v75 = vld [vmem:[#allocation3 + $0xc] sm:$0xf]
    %v76 = vld [vmem:[%s2] sm:$0x1]
    %v78 = vlaneseq
    %v79 = vshrl.u32 %v78, 7
    %v80 = vsub.s32 0, %v79
    %v81 = vrot.slane %v76, %v80
    %v87 = vunpack.c.l.b16 %v72
    %v88 = vunpack.c.l.b16 %v73
    %v89 = vunpack.c.l.b16 %v74
    %v90 = vunpack.c.l.b16 %v75
    %v91 = vpack.c.b16 %v88, %v87
    %v92 = vpack.c.b16 %v90, %v89
    %vm95 = vcmask 261120
    %v97 = vsel %vm95, %v71, 0
    %99 = vmatprep.subr.bf16.mxu0 0
    %100 = vmatpush1.bf16.msra.mxu0 %v91
    %101 = vmatprep.subr.bf16.mxu0 0
    %102 = vmatpush1.bf16.msra.mxu0 %v92
    %103 = vmatprep.subr.bf16.mxu0 0
    %104 = vmatpush1.bf16.msra.mxu0 0
    %105 = vmatprep.subr.bf16.mxu0 0
    %106 = vmatpush1.bf16.msra.mxu0 0
    %107 = vmatprep.subr.bf16.mxu0 0
    %108 = vmatpush1.bf16.msra.mxu0 0
    %109 = vmatprep.subr.bf16.mxu0 0
    %110 = vmatpush1.bf16.msra.mxu0 0
    %111 = vmatprep.subr.bf16.mxu0 0
    %112 = vmatpush1.bf16.msra.mxu0 0
    %113 = vmatprep.subr.bf16.mxu0 0
    %114 = vmatpush1.bf16.msra.mxu0 0
    %115 = vmatprep.subr.bf16.mxu0 0
    %116 = vmatpush1.bf16.msra.mxu0 0
    %117 = vmatprep.subr.bf16.mxu0 0
    %118 = vmatpush1.bf16.msra.mxu0 0
    %119 = vmatprep.subr.bf16.mxu0 0
    %120 = vmatpush1.bf16.msra.mxu0 0
    %121 = vmatprep.subr.bf16.mxu0 0
    %122 = vmatpush1.bf16.msra.mxu0 0
    %123 = vmatprep.subr.bf16.mxu0 0
    %124 = vmatpush1.bf16.msra.mxu0 0
    %125 = vmatprep.subr.bf16.mxu0 0
    %126 = vmatpush1.bf16.msra.mxu0 0
    %127 = vmatprep.subr.bf16.mxu0 0
    %128 = vmatpush1.bf16.msra.mxu0 0
    %129 = vmatprep.subr.bf16.mxu0 0
    %130 = vmatpush1.bf16.msra.mxu0 0
    %131 = vmatprep.mubr.bf16.mxu0 0
    %132 = vmatmul.mubr.bf16.gmra.mrb[0].mxu0 %v97
    %v133 = vpop.f32.mrb[0].mxu0
    %v134 = vadd.f32 %v81, %v133
    %v135 = vpop.f32.mrb[0].mxu0
    %v136 = vpop.f32.mrb[0].mxu0
    %v137 = vpop.f32.mrb[0].mxu0
    %138 = vdwg.mxu0
    %v139 = vtanh.pop %v134
    %v140 = vpack.c.bf16 %v139, %v139
    %v141 = vld [vmem:[#allocation5] sm:$0xf]
    %v142 = vld [vmem:[#allocation5 + $0x4] sm:$0xf]
    %v143 = vld [vmem:[#allocation5 + $0x8] sm:$0xf]
    %v144 = vld [vmem:[#allocation5 + $0xc] sm:$0xf]
    %v145 = vld [vmem:[#allocation5 + $0x10] sm:$0xf]
    %v146 = vld [vmem:[#allocation5 + $0x14] sm:$0xf]
    %v147 = vld [vmem:[#allocation5 + $0x18] sm:$0xf]
    %v148 = vld [vmem:[#allocation5 + $0x1c] sm:$0xf]
    %v149 = vld [vmem:[#allocation5 + $0x20] sm:$0xf]
    %v150 = vld [vmem:[#allocation5 + $0x24] sm:$0xf]
    %v151 = vld [vmem:[#allocation5 + $0x28] sm:$0xf]
    %v152 = vld [vmem:[#allocation5 + $0x2c] sm:$0xf]
    %v153 = vld [vmem:[#allocation5 + $0x30] sm:$0xf]
    %v154 = vld [vmem:[#allocation5 + $0x34] sm:$0xf]
    %v155 = vld [vmem:[#allocation5 + $0x38] sm:$0xf]
    %v156 = vld [vmem:[#allocation5 + $0x3c] sm:$0xf]
    %v157 = vld [vmem:[#allocation7] sm:$0x1]
    %v159 = vlaneseq
    %v160 = vshrl.u32 %v159, 7
    %v161 = vsub.s32 0, %v160
    %v162 = vrot.slane %v157, %v161
    %v180 = vunpack.c.l.b16 %v141
    %v181 = vunpack.c.l.b16 %v142
    %v182 = vunpack.c.l.b16 %v143
    %v183 = vunpack.c.l.b16 %v144
    %v184 = vunpack.c.l.b16 %v145
    %v185 = vunpack.c.l.b16 %v146
    %v186 = vunpack.c.l.b16 %v147
    %v187 = vunpack.c.l.b16 %v148
    %v188 = vunpack.c.l.b16 %v149
    %v189 = vunpack.c.l.b16 %v150
    %v190 = vunpack.c.l.b16 %v151
    %v191 = vunpack.c.l.b16 %v152
    %v192 = vunpack.c.l.b16 %v153
    %v193 = vunpack.c.l.b16 %v154
    %v194 = vunpack.c.l.b16 %v155
    %v195 = vunpack.c.l.b16 %v156
    %v196 = vpack.c.b16 %v181, %v180
    %v197 = vpack.c.b16 %v183, %v182
    %v198 = vpack.c.b16 %v185, %v184
    %v199 = vpack.c.b16 %v187, %v186
    %v200 = vpack.c.b16 %v189, %v188
    %v201 = vpack.c.b16 %v191, %v190
    %v202 = vpack.c.b16 %v193, %v192
    %v203 = vpack.c.b16 %v195, %v194
    %212 = vmatprep.subr.bf16.mxu0 0
    %213 = vmatpush1.bf16.msra.mxu0 %v196
    %214 = vmatprep.subr.bf16.mxu0 0
    %215 = vmatpush1.bf16.msra.mxu0 %v197
    %216 = vmatprep.subr.bf16.mxu0 0
    %217 = vmatpush1.bf16.msra.mxu0 %v198
    %218 = vmatprep.subr.bf16.mxu0 0
    %219 = vmatpush1.bf16.msra.mxu0 %v199
    %220 = vmatprep.subr.bf16.mxu0 0
    %221 = vmatpush1.bf16.msra.mxu0 %v200
    %222 = vmatprep.subr.bf16.mxu0 0
    %223 = vmatpush1.bf16.msra.mxu0 %v201
    %224 = vmatprep.subr.bf16.mxu0 0
    %225 = vmatpush1.bf16.msra.mxu0 %v202
    %226 = vmatprep.subr.bf16.mxu0 0
    %227 = vmatpush1.bf16.msra.mxu0 %v203
    %228 = vmatprep.subr.bf16.mxu0 0
    %229 = vmatpush1.bf16.msra.mxu0 0
    %230 = vmatprep.subr.bf16.mxu0 0
    %231 = vmatpush1.bf16.msra.mxu0 0
    %232 = vmatprep.subr.bf16.mxu0 0
    %233 = vmatpush1.bf16.msra.mxu0 0
    %234 = vmatprep.subr.bf16.mxu0 0
    %235 = vmatpush1.bf16.msra.mxu0 0
    %236 = vmatprep.subr.bf16.mxu0 0
    %237 = vmatpush1.bf16.msra.mxu0 0
    %238 = vmatprep.subr.bf16.mxu0 0
    %239 = vmatpush1.bf16.msra.mxu0 0
    %240 = vmatprep.subr.bf16.mxu0 0
    %241 = vmatpush1.bf16.msra.mxu0 0
    %242 = vmatprep.subr.bf16.mxu0 0
    %243 = vmatpush1.bf16.msra.mxu0 0
    %244 = vmatprep.mubr.bf16.mxu0 0
    %245 = vmatmul.mubr.bf16.gmra.mrb[0].mxu0 %v140
    %v246 = vpop.f32.mrb[0].mxu0
    %v247 = vadd.f32 %v162, %v246
    %v248 = vpop.f32.mrb[0].mxu0
    %v249 = vpop.f32.mrb[0].mxu0
    %v250 = vpop.f32.mrb[0].mxu0
    %251 = vdwg.mxu0
    %v252 = vtanh.pop %v247
    %v253 = vpack.c.bf16 %v252, %v252
    %s254 = scalar_lea.vmem [#allocation5], 64
    %v255 = vld [vmem:[%s254] sm:$0xf]
    %v256 = vld [vmem:[%s254 + $0x4] sm:$0xf]
    %v257 = vld [vmem:[%s254 + $0x8] sm:$0xf]
    %v258 = vld [vmem:[%s254 + $0xc] sm:$0xf]
    %v259 = vld [vmem:[%s254 + $0x10] sm:$0xf]
    %v260 = vld [vmem:[%s254 + $0x14] sm:$0xf]
    %v261 = vld [vmem:[%s254 + $0x18] sm:$0xf]
    %v262 = vld [vmem:[%s254 + $0x1c] sm:$0xf]
    %v263 = vld [vmem:[%s254 + $0x20] sm:$0xf]
    %v264 = vld [vmem:[%s254 + $0x24] sm:$0xf]
    %v265 = vld [vmem:[%s254 + $0x28] sm:$0xf]
    %v266 = vld [vmem:[%s254 + $0x2c] sm:$0xf]
    %v267 = vld [vmem:[%s254 + $0x30] sm:$0xf]
    %v268 = vld [vmem:[%s254 + $0x34] sm:$0xf]
    %v269 = vld [vmem:[%s254 + $0x38] sm:$0xf]
    %v270 = vld [vmem:[%s254 + $0x3c] sm:$0xf]
    %s271 = scalar_lea.vmem [#allocation7], 1
    %v272 = vld [vmem:[%s271] sm:$0x1]
    %v274 = vlaneseq
    %v275 = vshrl.u32 %v274, 7
    %v276 = vsub.s32 0, %v275
    %v277 = vrot.slane %v272, %v276
    %v295 = vunpack.c.l.b16 %v255
    %v296 = vunpack.c.l.b16 %v256
    %v297 = vunpack.c.l.b16 %v257
    %v298 = vunpack.c.l.b16 %v258
    %v299 = vunpack.c.l.b16 %v259
    %v300 = vunpack.c.l.b16 %v260
    %v301 = vunpack.c.l.b16 %v261
    %v302 = vunpack.c.l.b16 %v262
    %v303 = vunpack.c.l.b16 %v263
    %v304 = vunpack.c.l.b16 %v264
    %v305 = vunpack.c.l.b16 %v265
    %v306 = vunpack.c.l.b16 %v266
    %v307 = vunpack.c.l.b16 %v267
    %v308 = vunpack.c.l.b16 %v268
    %v309 = vunpack.c.l.b16 %v269
    %v310 = vunpack.c.l.b16 %v270
    %v311 = vpack.c.b16 %v296, %v295
    %v312 = vpack.c.b16 %v298, %v297
    %v313 = vpack.c.b16 %v300, %v299
    %v314 = vpack.c.b16 %v302, %v301
    %v315 = vpack.c.b16 %v304, %v303
    %v316 = vpack.c.b16 %v306, %v305
    %v317 = vpack.c.b16 %v308, %v307
    %v318 = vpack.c.b16 %v310, %v309
    %327 = vmatprep.subr.bf16.mxu0 0
    %328 = vmatpush1.bf16.msra.mxu0 %v311
    %329 = vmatprep.subr.bf16.mxu0 0
    %330 = vmatpush1.bf16.msra.mxu0 %v312
    %331 = vmatprep.subr.bf16.mxu0 0
    %332 = vmatpush1.bf16.msra.mxu0 %v313
    %333 = vmatprep.subr.bf16.mxu0 0
    %334 = vmatpush1.bf16.msra.mxu0 %v314
    %335 = vmatprep.subr.bf16.mxu0 0
    %336 = vmatpush1.bf16.msra.mxu0 %v315
    %337 = vmatprep.subr.bf16.mxu0 0
    %338 = vmatpush1.bf16.msra.mxu0 %v316
    %339 = vmatprep.subr.bf16.mxu0 0
    %340 = vmatpush1.bf16.msra.mxu0 %v317
    %341 = vmatprep.subr.bf16.mxu0 0
    %342 = vmatpush1.bf16.msra.mxu0 %v318
    %343 = vmatprep.subr.bf16.mxu0 0
    %344 = vmatpush1.bf16.msra.mxu0 0
    %345 = vmatprep.subr.bf16.mxu0 0
    %346 = vmatpush1.bf16.msra.mxu0 0
    %347 = vmatprep.subr.bf16.mxu0 0
    %348 = vmatpush1.bf16.msra.mxu0 0
    %349 = vmatprep.subr.bf16.mxu0 0
    %350 = vmatpush1.bf16.msra.mxu0 0
    %351 = vmatprep.subr.bf16.mxu0 0
    %352 = vmatpush1.bf16.msra.mxu0 0
    %353 = vmatprep.subr.bf16.mxu0 0
    %354 = vmatpush1.bf16.msra.mxu0 0
    %355 = vmatprep.subr.bf16.mxu0 0
    %356 = vmatpush1.bf16.msra.mxu0 0
    %357 = vmatprep.subr.bf16.mxu0 0
    %358 = vmatpush1.bf16.msra.mxu0 0
    %359 = vmatprep.mubr.bf16.mxu0 0
    %360 = vmatmul.mubr.bf16.gmra.mrb[0].mxu0 %v253
    %v361 = vpop.f32.mrb[0].mxu0
    %v362 = vadd.f32 %v277, %v361
    %v363 = vpop.f32.mrb[0].mxu0
    %v364 = vpop.f32.mrb[0].mxu0
    %v365 = vpop.f32.mrb[0].mxu0
    %366 = vdwg.mxu0
    %v367 = vtanh.pop %v362
    %v368 = vpack.c.bf16 %v367, %v367
    %s369 = scalar_lea.vmem [#allocation5], 128
    %v370 = vld [vmem:[%s369] sm:$0xf]
    %v371 = vld [vmem:[%s369 + $0x4] sm:$0xf]
    %v372 = vld [vmem:[%s369 + $0x8] sm:$0xf]
    %v373 = vld [vmem:[%s369 + $0xc] sm:$0xf]
    %v374 = vld [vmem:[%s369 + $0x10] sm:$0xf]
    %v375 = vld [vmem:[%s369 + $0x14] sm:$0xf]
    %v376 = vld [vmem:[%s369 + $0x18] sm:$0xf]
    %v377 = vld [vmem:[%s369 + $0x1c] sm:$0xf]
    %v378 = vld [vmem:[%s369 + $0x20] sm:$0xf]
    %v379 = vld [vmem:[%s369 + $0x24] sm:$0xf]
    %v380 = vld [vmem:[%s369 + $0x28] sm:$0xf]
    %v381 = vld [vmem:[%s369 + $0x2c] sm:$0xf]
    %v382 = vld [vmem:[%s369 + $0x30] sm:$0xf]
    %v383 = vld [vmem:[%s369 + $0x34] sm:$0xf]
    %v384 = vld [vmem:[%s369 + $0x38] sm:$0xf]
    %v385 = vld [vmem:[%s369 + $0x3c] sm:$0xf]
    %s386 = scalar_lea.vmem [#allocation7], 2
    %v387 = vld [vmem:[%s386] sm:$0x1]
    %v389 = vlaneseq
    %v390 = vshrl.u32 %v389, 7
    %v391 = vsub.s32 0, %v390
    %v392 = vrot.slane %v387, %v391
    %v410 = vunpack.c.l.b16 %v370
    %v411 = vunpack.c.l.b16 %v371
    %v412 = vunpack.c.l.b16 %v372
    %v413 = vunpack.c.l.b16 %v373
    %v414 = vunpack.c.l.b16 %v374
    %v415 = vunpack.c.l.b16 %v375
    %v416 = vunpack.c.l.b16 %v376
    %v417 = vunpack.c.l.b16 %v377
    %v418 = vunpack.c.l.b16 %v378
    %v419 = vunpack.c.l.b16 %v379
    %v420 = vunpack.c.l.b16 %v380
    %v421 = vunpack.c.l.b16 %v381
    %v422 = vunpack.c.l.b16 %v382
    %v423 = vunpack.c.l.b16 %v383
    %v424 = vunpack.c.l.b16 %v384
    %v425 = vunpack.c.l.b16 %v385
    %v426 = vpack.c.b16 %v411, %v410
    %v427 = vpack.c.b16 %v413, %v412
    %v428 = vpack.c.b16 %v415, %v414
    %v429 = vpack.c.b16 %v417, %v416
    %v430 = vpack.c.b16 %v419, %v418
    %v431 = vpack.c.b16 %v421, %v420
    %v432 = vpack.c.b16 %v423, %v422
    %v433 = vpack.c.b16 %v425, %v424
    %442 = vmatprep.subr.bf16.mxu0 0
    %443 = vmatpush1.bf16.msra.mxu0 %v426
    %444 = vmatprep.subr.bf16.mxu0 0
    %445 = vmatpush1.bf16.msra.mxu0 %v427
    %446 = vmatprep.subr.bf16.mxu0 0
    %447 = vmatpush1.bf16.msra.mxu0 %v428
    %448 = vmatprep.subr.bf16.mxu0 0
    %449 = vmatpush1.bf16.msra.mxu0 %v429
    %450 = vmatprep.subr.bf16.mxu0 0
    %451 = vmatpush1.bf16.msra.mxu0 %v430
    %452 = vmatprep.subr.bf16.mxu0 0
    %453 = vmatpush1.bf16.msra.mxu0 %v431
    %454 = vmatprep.subr.bf16.mxu0 0
    %455 = vmatpush1.bf16.msra.mxu0 %v432
    %456 = vmatprep.subr.bf16.mxu0 0
    %457 = vmatpush1.bf16.msra.mxu0 %v433
    %458 = vmatprep.subr.bf16.mxu0 0
    %459 = vmatpush1.bf16.msra.mxu0 0
    %460 = vmatprep.subr.bf16.mxu0 0
    %461 = vmatpush1.bf16.msra.mxu0 0
    %462 = vmatprep.subr.bf16.mxu0 0
    %463 = vmatpush1.bf16.msra.mxu0 0
    %464 = vmatprep.subr.bf16.mxu0 0
    %465 = vmatpush1.bf16.msra.mxu0 0
    %466 = vmatprep.subr.bf16.mxu0 0
    %467 = vmatpush1.bf16.msra.mxu0 0
    %468 = vmatprep.subr.bf16.mxu0 0
    %469 = vmatpush1.bf16.msra.mxu0 0
    %470 = vmatprep.subr.bf16.mxu0 0
    %471 = vmatpush1.bf16.msra.mxu0 0
    %472 = vmatprep.subr.bf16.mxu0 0
    %473 = vmatpush1.bf16.msra.mxu0 0
    %474 = vmatprep.mubr.bf16.mxu0 0
    %475 = vmatmul.mubr.bf16.gmra.mrb[0].mxu0 %v368
    %v476 = vpop.f32.mrb[0].mxu0
    %v477 = vadd.f32 %v392, %v476
    %v478 = vpop.f32.mrb[0].mxu0
    %v479 = vpop.f32.mrb[0].mxu0
    %v480 = vpop.f32.mrb[0].mxu0
    %481 = vdwg.mxu0
    %v482 = vtanh.pop %v477
    %v483 = vpack.c.bf16 %v482, %v482
    %s484 = scalar_lea.vmem [#allocation5], 192
    %v485 = vld [vmem:[%s484] sm:$0xf]
    %v486 = vld [vmem:[%s484 + $0x4] sm:$0xf]
    %v487 = vld [vmem:[%s484 + $0x8] sm:$0xf]
    %v488 = vld [vmem:[%s484 + $0xc] sm:$0xf]
    %v489 = vld [vmem:[%s484 + $0x10] sm:$0xf]
    %v490 = vld [vmem:[%s484 + $0x14] sm:$0xf]
    %v491 = vld [vmem:[%s484 + $0x18] sm:$0xf]
    %v492 = vld [vmem:[%s484 + $0x1c] sm:$0xf]
    %v493 = vld [vmem:[%s484 + $0x20] sm:$0xf]
    %v494 = vld [vmem:[%s484 + $0x24] sm:$0xf]
    %v495 = vld [vmem:[%s484 + $0x28] sm:$0xf]
    %v496 = vld [vmem:[%s484 + $0x2c] sm:$0xf]
    %v497 = vld [vmem:[%s484 + $0x30] sm:$0xf]
    %v498 = vld [vmem:[%s484 + $0x34] sm:$0xf]
    %v499 = vld [vmem:[%s484 + $0x38] sm:$0xf]
    %v500 = vld [vmem:[%s484 + $0x3c] sm:$0xf]
    %s501 = scalar_lea.vmem [#allocation7], 3
    %v502 = vld [vmem:[%s501] sm:$0x1]
    %v504 = vlaneseq
    %v505 = vshrl.u32 %v504, 7
    %v506 = vsub.s32 0, %v505
    %v507 = vrot.slane %v502, %v506
    %v525 = vunpack.c.l.b16 %v485
    %v526 = vunpack.c.l.b16 %v486
    %v527 = vunpack.c.l.b16 %v487
    %v528 = vunpack.c.l.b16 %v488
    %v529 = vunpack.c.l.b16 %v489
    %v530 = vunpack.c.l.b16 %v490
    %v531 = vunpack.c.l.b16 %v491
    %v532 = vunpack.c.l.b16 %v492
    %v533 = vunpack.c.l.b16 %v493
    %v534 = vunpack.c.l.b16 %v494
    %v535 = vunpack.c.l.b16 %v495
    %v536 = vunpack.c.l.b16 %v496
    %v537 = vunpack.c.l.b16 %v497
    %v538 = vunpack.c.l.b16 %v498
    %v539 = vunpack.c.l.b16 %v499
    %v540 = vunpack.c.l.b16 %v500
    %v541 = vpack.c.b16 %v526, %v525
    %v542 = vpack.c.b16 %v528, %v527
    %v543 = vpack.c.b16 %v530, %v529
    %v544 = vpack.c.b16 %v532, %v531
    %v545 = vpack.c.b16 %v534, %v533
    %v546 = vpack.c.b16 %v536, %v535
    %v547 = vpack.c.b16 %v538, %v537
    %v548 = vpack.c.b16 %v540, %v539
    %557 = vmatprep.subr.bf16.mxu0 0
    %558 = vmatpush1.bf16.msra.mxu0 %v541
    %559 = vmatprep.subr.bf16.mxu0 0
    %560 = vmatpush1.bf16.msra.mxu0 %v542
    %561 = vmatprep.subr.bf16.mxu0 0
    %562 = vmatpush1.bf16.msra.mxu0 %v543
    %563 = vmatprep.subr.bf16.mxu0 0
    %564 = vmatpush1.bf16.msra.mxu0 %v544
    %565 = vmatprep.subr.bf16.mxu0 0
    %566 = vmatpush1.bf16.msra.mxu0 %v545
    %567 = vmatprep.subr.bf16.mxu0 0
    %568 = vmatpush1.bf16.msra.mxu0 %v546
    %569 = vmatprep.subr.bf16.mxu0 0
    %570 = vmatpush1.bf16.msra.mxu0 %v547
    %571 = vmatprep.subr.bf16.mxu0 0
    %572 = vmatpush1.bf16.msra.mxu0 %v548
    %573 = vmatprep.subr.bf16.mxu0 0
    %574 = vmatpush1.bf16.msra.mxu0 0
    %575 = vmatprep.subr.bf16.mxu0 0
    %576 = vmatpush1.bf16.msra.mxu0 0
    %577 = vmatprep.subr.bf16.mxu0 0
    %578 = vmatpush1.bf16.msra.mxu0 0
    %579 = vmatprep.subr.bf16.mxu0 0
    %580 = vmatpush1.bf16.msra.mxu0 0
    %581 = vmatprep.subr.bf16.mxu0 0
    %582 = vmatpush1.bf16.msra.mxu0 0
    %583 = vmatprep.subr.bf16.mxu0 0
    %584 = vmatpush1.bf16.msra.mxu0 0
    %585 = vmatprep.subr.bf16.mxu0 0
    %586 = vmatpush1.bf16.msra.mxu0 0
    %587 = vmatprep.subr.bf16.mxu0 0
    %588 = vmatpush1.bf16.msra.mxu0 0
    %589 = vmatprep.mubr.bf16.mxu0 0
    %590 = vmatmul.mubr.bf16.gmra.mrb[0].mxu0 %v483
    %v591 = vpop.f32.mrb[0].mxu0
    %v592 = vadd.f32 %v507, %v591
    %v593 = vpop.f32.mrb[0].mxu0
    %v594 = vpop.f32.mrb[0].mxu0
    %v595 = vpop.f32.mrb[0].mxu0
    %596 = vdwg.mxu0
    %v597 = vtanh.pop %v592
    %v598 = vpack.c.bf16 %v597, %v597
    %s599 = scalar_lea.vmem [#allocation5], 256
    %v600 = vld [vmem:[%s599] sm:$0xf]
    %v601 = vld [vmem:[%s599 + $0x4] sm:$0xf]
    %v602 = vld [vmem:[%s599 + $0x8] sm:$0xf]
    %v603 = vld [vmem:[%s599 + $0xc] sm:$0xf]
    %v604 = vld [vmem:[%s599 + $0x10] sm:$0xf]
    %v605 = vld [vmem:[%s599 + $0x14] sm:$0xf]
    %v606 = vld [vmem:[%s599 + $0x18] sm:$0xf]
    %v607 = vld [vmem:[%s599 + $0x1c] sm:$0xf]
    %v608 = vld [vmem:[%s599 + $0x20] sm:$0xf]
    %v609 = vld [vmem:[%s599 + $0x24] sm:$0xf]
    %v610 = vld [vmem:[%s599 + $0x28] sm:$0xf]
    %v611 = vld [vmem:[%s599 + $0x2c] sm:$0xf]
    %v612 = vld [vmem:[%s599 + $0x30] sm:$0xf]
    %v613 = vld [vmem:[%s599 + $0x34] sm:$0xf]
    %v614 = vld [vmem:[%s599 + $0x38] sm:$0xf]
    %v615 = vld [vmem:[%s599 + $0x3c] sm:$0xf]
    %s616 = scalar_lea.vmem [#allocation7], 4
    %v617 = vld [vmem:[%s616] sm:$0x1]
    %v619 = vlaneseq
    %v620 = vshrl.u32 %v619, 7
    %v621 = vsub.s32 0, %v620
    %v622 = vrot.slane %v617, %v621
    %v640 = vunpack.c.l.b16 %v600
    %v641 = vunpack.c.l.b16 %v601
    %v642 = vunpack.c.l.b16 %v602
    %v643 = vunpack.c.l.b16 %v603
    %v644 = vunpack.c.l.b16 %v604
    %v645 = vunpack.c.l.b16 %v605
    %v646 = vunpack.c.l.b16 %v606
    %v647 = vunpack.c.l.b16 %v607
    %v648 = vunpack.c.l.b16 %v608
    %v649 = vunpack.c.l.b16 %v609
    %v650 = vunpack.c.l.b16 %v610
    %v651 = vunpack.c.l.b16 %v611
    %v652 = vunpack.c.l.b16 %v612
    %v653 = vunpack.c.l.b16 %v613
    %v654 = vunpack.c.l.b16 %v614
    %v655 = vunpack.c.l.b16 %v615
    %v656 = vpack.c.b16 %v641, %v640
    %v657 = vpack.c.b16 %v643, %v642
    %v658 = vpack.c.b16 %v645, %v644
    %v659 = vpack.c.b16 %v647, %v646
    %v660 = vpack.c.b16 %v649, %v648
    %v661 = vpack.c.b16 %v651, %v650
    %v662 = vpack.c.b16 %v653, %v652
    %v663 = vpack.c.b16 %v655, %v654
    %672 = vmatprep.subr.bf16.mxu0 0
    %673 = vmatpush1.bf16.msra.mxu0 %v656
    %674 = vmatprep.subr.bf16.mxu0 0
    %675 = vmatpush1.bf16.msra.mxu0 %v657
    %676 = vmatprep.subr.bf16.mxu0 0
    %677 = vmatpush1.bf16.msra.mxu0 %v658
    %678 = vmatprep.subr.bf16.mxu0 0
    %679 = vmatpush1.bf16.msra.mxu0 %v659
    %680 = vmatprep.subr.bf16.mxu0 0
    %681 = vmatpush1.bf16.msra.mxu0 %v660
    %682 = vmatprep.subr.bf16.mxu0 0
    %683 = vmatpush1.bf16.msra.mxu0 %v661
    %684 = vmatprep.subr.bf16.mxu0 0
    %685 = vmatpush1.bf16.msra.mxu0 %v662
    %686 = vmatprep.subr.bf16.mxu0 0
    %687 = vmatpush1.bf16.msra.mxu0 %v663
    %688 = vmatprep.subr.bf16.mxu0 0
    %689 = vmatpush1.bf16.msra.mxu0 0
    %690 = vmatprep.subr.bf16.mxu0 0
    %691 = vmatpush1.bf16.msra.mxu0 0
    %692 = vmatprep.subr.bf16.mxu0 0
    %693 = vmatpush1.bf16.msra.mxu0 0
    %694 = vmatprep.subr.bf16.mxu0 0
    %695 = vmatpush1.bf16.msra.mxu0 0
    %696 = vmatprep.subr.bf16.mxu0 0
    %697 = vmatpush1.bf16.msra.mxu0 0
    %698 = vmatprep.subr.bf16.mxu0 0
    %699 = vmatpush1.bf16.msra.mxu0 0
    %700 = vmatprep.subr.bf16.mxu0 0
    %701 = vmatpush1.bf16.msra.mxu0 0
    %702 = vmatprep.subr.bf16.mxu0 0
    %703 = vmatpush1.bf16.msra.mxu0 0
    %704 = vmatprep.mubr.bf16.mxu0 0
    %705 = vmatmul.mubr.bf16.gmra.mrb[0].mxu0 %v598
    %v706 = vpop.f32.mrb[0].mxu0
    %v707 = vadd.f32 %v622, %v706
    %v708 = vpop.f32.mrb[0].mxu0
    %v709 = vpop.f32.mrb[0].mxu0
    %v710 = vpop.f32.mrb[0].mxu0
    %711 = vdwg.mxu0
    %v712 = vtanh.pop %v707
    %v713 = vpack.c.bf16 %v712, %v712
    %s714 = scalar_lea.vmem [#allocation5], 320
    %v715 = vld [vmem:[%s714] sm:$0xf]
    %v716 = vld [vmem:[%s714 + $0x4] sm:$0xf]
    %v717 = vld [vmem:[%s714 + $0x8] sm:$0xf]
    %v718 = vld [vmem:[%s714 + $0xc] sm:$0xf]
    %v719 = vld [vmem:[%s714 + $0x10] sm:$0xf]
    %v720 = vld [vmem:[%s714 + $0x14] sm:$0xf]
    %v721 = vld [vmem:[%s714 + $0x18] sm:$0xf]
    %v722 = vld [vmem:[%s714 + $0x1c] sm:$0xf]
    %v723 = vld [vmem:[%s714 + $0x20] sm:$0xf]
    %v724 = vld [vmem:[%s714 + $0x24] sm:$0xf]
    %v725 = vld [vmem:[%s714 + $0x28] sm:$0xf]
    %v726 = vld [vmem:[%s714 + $0x2c] sm:$0xf]
    %v727 = vld [vmem:[%s714 + $0x30] sm:$0xf]
    %v728 = vld [vmem:[%s714 + $0x34] sm:$0xf]
    %v729 = vld [vmem:[%s714 + $0x38] sm:$0xf]
    %v730 = vld [vmem:[%s714 + $0x3c] sm:$0xf]
    %s731 = scalar_lea.vmem [#allocation7], 5
    %v732 = vld [vmem:[%s731] sm:$0x1]
    %v734 = vlaneseq
    %v735 = vshrl.u32 %v734, 7
    %v736 = vsub.s32 0, %v735
    %v737 = vrot.slane %v732, %v736
    %v755 = vunpack.c.l.b16 %v715
    %v756 = vunpack.c.l.b16 %v716
    %v757 = vunpack.c.l.b16 %v717
    %v758 = vunpack.c.l.b16 %v718
    %v759 = vunpack.c.l.b16 %v719
    %v760 = vunpack.c.l.b16 %v720
    %v761 = vunpack.c.l.b16 %v721
    %v762 = vunpack.c.l.b16 %v722
    %v763 = vunpack.c.l.b16 %v723
    %v764 = vunpack.c.l.b16 %v724
    %v765 = vunpack.c.l.b16 %v725
    %v766 = vunpack.c.l.b16 %v726
    %v767 = vunpack.c.l.b16 %v727
    %v768 = vunpack.c.l.b16 %v728
    %v769 = vunpack.c.l.b16 %v729
    %v770 = vunpack.c.l.b16 %v730
    %v771 = vpack.c.b16 %v756, %v755
    %v772 = vpack.c.b16 %v758, %v757
    %v773 = vpack.c.b16 %v760, %v759
    %v774 = vpack.c.b16 %v762, %v761
    %v775 = vpack.c.b16 %v764, %v763
    %v776 = vpack.c.b16 %v766, %v765
    %v777 = vpack.c.b16 %v768, %v767
    %v778 = vpack.c.b16 %v770, %v769
    %787 = vmatprep.subr.bf16.mxu0 0
    %788 = vmatpush1.bf16.msra.mxu0 %v771
    %789 = vmatprep.subr.bf16.mxu0 0
    %790 = vmatpush1.bf16.msra.mxu0 %v772
    %791 = vmatprep.subr.bf16.mxu0 0
    %792 = vmatpush1.bf16.msra.mxu0 %v773
    %793 = vmatprep.subr.bf16.mxu0 0
    %794 = vmatpush1.bf16.msra.mxu0 %v774
    %795 = vmatprep.subr.bf16.mxu0 0
    %796 = vmatpush1.bf16.msra.mxu0 %v775
    %797 = vmatprep.subr.bf16.mxu0 0
    %798 = vmatpush1.bf16.msra.mxu0 %v776
    %799 = vmatprep.subr.bf16.mxu0 0
    %800 = vmatpush1.bf16.msra.mxu0 %v777
    %801 = vmatprep.subr.bf16.mxu0 0
    %802 = vmatpush1.bf16.msra.mxu0 %v778
    %803 = vmatprep.subr.bf16.mxu0 0
    %804 = vmatpush1.bf16.msra.mxu0 0
    %805 = vmatprep.subr.bf16.mxu0 0
    %806 = vmatpush1.bf16.msra.mxu0 0
    %807 = vmatprep.subr.bf16.mxu0 0
    %808 = vmatpush1.bf16.msra.mxu0 0
    %809 = vmatprep.subr.bf16.mxu0 0
    %810 = vmatpush1.bf16.msra.mxu0 0
    %811 = vmatprep.subr.bf16.mxu0 0
    %812 = vmatpush1.bf16.msra.mxu0 0
    %813 = vmatprep.subr.bf16.mxu0 0
    %814 = vmatpush1.bf16.msra.mxu0 0
    %815 = vmatprep.subr.bf16.mxu0 0
    %816 = vmatpush1.bf16.msra.mxu0 0
    %817 = vmatprep.subr.bf16.mxu0 0
    %818 = vmatpush1.bf16.msra.mxu0 0
    %819 = vmatprep.mubr.bf16.mxu0 0
    %820 = vmatmul.mubr.bf16.gmra.mrb[0].mxu0 %v713
    %v821 = vpop.f32.mrb[0].mxu0
    %v822 = vadd.f32 %v737, %v821
    %v823 = vpop.f32.mrb[0].mxu0
    %v824 = vpop.f32.mrb[0].mxu0
    %v825 = vpop.f32.mrb[0].mxu0
    %826 = vdwg.mxu0
    %v827 = vtanh.pop %v822
    %v828 = vld [vmem:[%s5] sm:$0x1]
    %v829 = vunpack.c.l.bf16 %v828
    %v830 = vlaneseq
    %v831 = vshrl.u32 %v830, 7
    %v832 = vsub.s32 0, %v831
    %v833 = vrot.slane %v829, %v832
    %v834 = vmul.f32 %v827, %v833
    %835 = vadd.xlane.f32.xlu0 %v834
    %v836 = vpop.xlane.xlu0 %835
    %v837 = vld [vmem:[#allocation2] sm:$0x1]
    %v839 = vlaneseq
    %v840 = vshrl.u32 %v839, 7
    %v841 = vsub.s32 0, %v840
    %v842 = vrot.slane %v837, %v841
    %v844 = vadd.f32 %v836, %v842
    %vm845 = vcmask 7168
    %846 = vst.msk [vmem:[%s7] sm:$0xff] %vm845, %v844
    // Predicated region
    $region42: #{critic_forward.1} parent=1 // pred_check
      _
    $region43: #{critic_forward.1} parent=1 // pred_check_branch
      %848 = sbr.rel (0) target = $region45
    $region44: #{critic_forward.1} parent=1 // pred_region
      _
    $region45: #{critic_forward.1} parent=1 // pred_fallthru
      _
    // Predicated region
    $region46: #{critic_forward.1} parent=1 // pred_check
      _
    $region47: #{critic_forward.1} parent=1 // pred_check_branch
      %850 = sbr.rel (0) target = $region49
    $region48: #{critic_forward.1} parent=1 // pred_region
      _
    $region49: #{critic_forward.1} parent=1 // pred_fallthru
      _
    %851 = vsyncpa [#allocation4], 1
    %852 = vsyncpa [#allocation6], 1

</llo_original>
